<compile_context>
chip_gen: v7x
topology: tpu7x:2x2x1
jax: 0.10.0
libtpu: 0.0.40
codegen_flags: <defaults>
</compile_context>

<pallas_src>
import functools

import jax
import jax.numpy as jnp
from jax.experimental import pallas as pl
from jax.experimental.pallas import tpu as pltpu


_VMEM = pl.BlockSpec(memory_space=pltpu.MemorySpace.VMEM)
_SMEM = pl.BlockSpec(memory_space=pltpu.MemorySpace.SMEM)


# ----------------------------------------------------------------------------
# Fused coarse-path kernel
# ----------------------------------------------------------------------------

def _coarse_fused_kernel(
    # inputs
    feats_ref, compat_ref,
    ref_nodes_ref, src_nodes_t_ref,
    w1f_ref, w1c_ref, b1_ref, w2_ref, b2_ref, w3r_ref,
    wout_ref, bout_ref, b3_ref,
    # outputs
    ref_ov_ref, src_ov_ref,
    ref_fc_ref, src_fc_ref,
    gt_ov_ref, scores_ref,
    *, sigma_r):
    """One launch for the full CAST coarse path.

    Computes:
      * overlap_head(feats, compat) for ref & src (batched, UnaryBlock x2 +
        Linear + Sigmoid).  TODO(synk): UnaryBlock's GroupNorm/BatchNorm is
        omitted (norm config lives outside this module); UnaryBlock here is
        Linear + LeakyReLU(0.1).
      * out_proj(feats) for ref & src (batched).
      * gt patch overlap from cdist(ref_nodes, transformed src_nodes).
      * dual-softmax feature matching scores with the predicted-overlap gate
        folded into the softmax normalizers.
        TODO(synk): SpotGuidedGeoTransformer.matching_scores is an external
        submodule; approximated with the standard dual-softmax similarity.
    """
    n = ref_nodes_ref.shape[0]                  # ref rows in the batched block

    feats = feats_ref[...]                      # (N+M, H) bf16 (pre-cast)
    compat = compat_ref[...]                    # (N+M, B) f32

    w1f = w1f_ref[...]                          # (H, H) bf16
    w1c = w1c_ref[...]                          # (B, H) f32 (VPU path)
    b1 = b1_ref[...]                            # (1, H)
    w2 = w2_ref[...]                            # (H, H) bf16
    b2 = b2_ref[...]                            # (1, H)
    w3_row = w3r_ref[...]                       # (1, H) f32
    b3 = b3_ref[0, 0]                           # scalar, SMEM

    # --- overlap head, ref+src batched through one MXU pass per weight ------
    h = jnp.dot(feats, w1f, preferred_element_type=jnp.float32)
    # Narrow (B-wide) compat contraction as unrolled VPU broadcast-mul-adds
    # instead of a lane-starved MXU dot.
    for k in range(compat.shape[-1]):
        h = h + compat[:, k:k + 1] * w1c[k:k + 1, :]
    h = h + b1
    h = jnp.maximum(h, 0.1 * h)                 # LeakyReLU(0.1), single VALU max
    h = jnp.dot(h.astype(jnp.bfloat16), w2,
                preferred_element_type=jnp.float32) + b2
    h = jnp.maximum(h, 0.1 * h)

    # ref logits: lane reduction (XLU).  src logits: produced directly in
    # (1, M) lane layout via a tiny contraction so no transpose is needed for
    # the column-softmax gate.
    ro = jax.nn.sigmoid(
        jnp.sum(h[:n] * w3_row, axis=-1, keepdims=True) + b3)        # (N, 1)
    so_t = jax.nn.sigmoid(
        jax.lax.dot_general(w3_row, h[n:], (((1,), (1,)), ((), ())),
                            preferred_element_type=jnp.float32) + b3)  # (1, M)
    ref_ov_ref[...] = ro
    src_ov_ref[...] = so_t

    # --- out_proj (ref+src batched, weights loaded into VMEM once) ----------
    wout = wout_ref[...]                        # (H, Dout) bf16
    bout = bout_ref[...]                        # (1, Dout)
    fc = jnp.dot(feats, wout, preferred_element_type=jnp.float32) + bout
    rfc = fc[:n]                                # (N, Dout)
    sfc = fc[n:]                                # (M, Dout)
    ref_fc_ref[...] = rfc
    src_fc_ref[...] = sfc

    # --- gt patch overlap: cdist + clamp + cubic kernel (pure VPU) ----------
    a = ref_nodes_ref[...]                      # (N, 3)
    bt = src_nodes_t_ref[...]                   # (3, M)  pre-transformed, transposed
    diff = a[:, 0:1] - bt[0:1, :]
    d2 = diff * diff
    for k in range(1, 3):
        diff = a[:, k:k + 1] - bt[k:k + 1, :]
        d2 = d2 + diff * diff
    d = jnp.minimum(jnp.sqrt(jnp.maximum(d2, 0.0)) / sigma_r, 2.0)
    gt_ov_ref[...] = jnp.maximum(1.0 + d * d * d / 16.0 - 0.75 * d, 0.0)

    # --- dual-softmax matching scores, overlap gate folded into normalizers -
    dim = rfc.shape[-1]
    scale = 1.0 / float(dim) ** 0.5
    s = jax.lax.dot_general(
        (rfc * scale).astype(jnp.bfloat16), sfc.astype(jnp.bfloat16),
        (((1,), (1,)), ((), ())),
        preferred_element_type=jnp.float32)     # (N, M)
    row_max = jnp.max(s, axis=-1, keepdims=True)          # (N, 1)
    gm = jnp.max(row_max, axis=0, keepdims=True)          # (1, 1) global max
    e_row = jnp.exp(s - row_max)                           # single (N,M) exp
    row_fac = jnp.exp(row_max - gm)                        # (N,1), <= 1
    g = e_row * row_fac                                    # = exp(s - gm)
    row_sum = jnp.sum(e_row, axis=-1, keepdims=True)       # (N, 1)
    col_sum = jnp.sum(g, axis=0, keepdims=True)            # (1, M)
    # gate folded: row reciprocal * ro, column reciprocal * so^T (no rank-1
    # matmul, no extra (N,M) temporary).  eps guards a fully-underflowed
    # column (only if a column sits >~88 below the global max).
    row_gate = pl.reciprocal(row_sum, approx=True) * ro
    col_gate = pl.reciprocal(col_sum + 1e-30, approx=True) * so_t
    scores_ref[...] = (e_row * row_gate) * (g * col_gate)


def pallas_coarse_fused(ref_feats, src_feats, ref_compat, src_compat,
                        ref_nodes, src_nodes_gt_t, params, sigma_r):
    """Single pallas_call for the whole coarse path (small arrays, all VMEM).

    TODO(synk): at realistic CAST node counts (and especially on v7x with
    64 MiB VMEM / 2 TensorCores) this single-block layout should become a
    row-tiled 'parallel' grid with a two-pass column softmax.
    """
    (w1, b1), (w2, b2), (w3, b3) = params["overlap_head"]
    w_out, b_out = params["out_proj"]
    hidden = ref_feats.shape[-1]
    w1f = w1[:hidden]                  # (H, H)   feature part
    w1c = w1[hidden:]                  # (B, H)   compat part
    n, m = ref_feats.shape[0], src_feats.shape[0]
    dout = w_out.shape[1]

    # ref + src batched through one operand; MXU inputs pre-cast to bf16.
    feats_all = jnp.concatenate([ref_feats, src_feats], axis=0).astype(jnp.bfloat16)
    compat_all = jnp.concatenate([ref_compat, src_compat], axis=0)

    out_shapes = (
        jax.ShapeDtypeStruct((n, 1), jnp.float32),      # ref_patch_overlap
        jax.ShapeDtypeStruct((1, m), jnp.float32),      # src_patch_overlap (lane layout)
        jax.ShapeDtypeStruct((n, dout), jnp.float32),   # ref_feats_c
        jax.ShapeDtypeStruct((m, dout), jnp.float32),   # src_feats_c
        jax.ShapeDtypeStruct((n, m), jnp.float32),      # gt patch overlaps
        jax.ShapeDtypeStruct((n, m), jnp.float32),      # coarse matching scores
    )
    return pl.pallas_call(
        functools.partial(_coarse_fused_kernel, sigma_r=float(sigma_r)),
        out_shape=out_shapes,
        in_specs=[_VMEM] * 12 + [_SMEM],
        out_specs=[_VMEM] * 6,
        compiler_params=pltpu.CompilerParams(vmem_limit_bytes=32 * 1024 * 1024),
    )(feats_all, compat_all,
      ref_nodes, src_nodes_gt_t,
      w1f.astype(jnp.bfloat16), w1c, b1.reshape(1, -1),
      w2.astype(jnp.bfloat16), b2.reshape(1, -1),
      w3.reshape(1, -1),
      w_out.astype(jnp.bfloat16), b_out.reshape(1, -1),
      b3.reshape(1, 1))


# ----------------------------------------------------------------------------
# Descriptor linear (row-tiled, megacore-parallel, bf16 inputs, no concat)
# ----------------------------------------------------------------------------

def _descriptor_kernel(x_ref, w_ref, b_ref, o_ref):
    o_ref[...] = jnp.dot(x_ref[...], w_ref[...],
                         preferred_element_type=jnp.float32) + b_ref[...]


def pallas_descriptor(feats_bf16, w_bf16, b, row_tile=1024):
    n, din = feats_bf16.shape
    dout = w_bf16.shape[1]
    tile = n if n <= row_tile else row_tile
    grid = (pl.cdiv(n, tile),)
    return pl.pallas_call(
        _descriptor_kernel,
        out_shape=jax.ShapeDtypeStruct((n, dout), jnp.float32),
        grid=grid,
        in_specs=[pl.BlockSpec((tile, din), lambda i: (i, 0)),
                  pl.BlockSpec((din, dout), lambda i: (0, 0)),
                  pl.BlockSpec((1, dout), lambda i: (0, 0))],
        out_specs=pl.BlockSpec((tile, dout), lambda i: (i, 0)),
        compiler_params=pltpu.CompilerParams(
            dimension_semantics=("parallel",)),
    )(feats_bf16, w_bf16, b.reshape(1, -1))


# ----------------------------------------------------------------------------
# Plain-JAX glue
# ----------------------------------------------------------------------------

def apply_transform(points, transform):
    rot = transform[:3, :3]
    trans = transform[:3, 3]
    return points @ rot.T + trans


def mutual_nn_mask(scores):
    n, m = scores.shape
    row_best = jnp.argmax(scores, axis=-1)               # (N,)
    col_best = jnp.argmax(scores, axis=0)                # (M,)
    row_mask = jax.nn.one_hot(row_best, m, dtype=jnp.bool_)
    col_mask = jnp.transpose(jax.nn.one_hot(col_best, n, dtype=jnp.bool_))
    return jnp.logical_and(row_mask, col_mask)


def weighted_svd_soft(src_pts, ref_pts, weight_matrix):
    """Weighted Kabsch over a (N_ref, M_src) soft-correspondence weight matrix.
    Returns the 4x4 transform mapping src -> ref."""
    w = weight_matrix
    w_sum = jnp.sum(w) + 1e-8
    wr = jnp.sum(w, axis=1)                               # (N,)
    ws = jnp.sum(w, axis=0)                               # (M,)
    cr = (wr @ ref_pts) / w_sum                           # (3,)
    cs = (ws @ src_pts) / w_sum
    ref_c = ref_pts - cr
    src_c = src_pts - cs
    h = src_c.T @ (w.T @ ref_c)                           # (3, 3)
    u, _, vt = jnp.linalg.svd(h)
    det = jnp.linalg.det(vt.T @ u.T)
    d = jnp.diag(jnp.array([1.0, 1.0, 1.0])).at[2, 2].set(det)
    rot = vt.T @ d @ u.T
    trans = cr - rot @ cs
    transform = jnp.eye(4, dtype=jnp.float32)
    transform = transform.at[:3, :3].set(rot)
    transform = transform.at[:3, 3].set(trans)
    return transform


# ----------------------------------------------------------------------------
# CAST forward core (the parts expressed directly in CAST.forward)
# ----------------------------------------------------------------------------

def cast_forward_core(inputs, params, cfg):
    ref_nodes = inputs["ref_nodes"]            # points_list1[2]   (Nc1, 3)
    src_nodes = inputs["src_nodes"]            # points_list2[2]   (Nc2, 3)
    ref_feats = inputs["ref_feats"]            # transformer out   (Nc1, hidden)
    src_feats = inputs["src_feats"]            # transformer out   (Nc2, hidden)
    ref_compat = inputs["ref_compat"]          # (Nc1, blocks)
    src_compat = inputs["src_compat"]          # (Nc2, blocks)
    ref_feats_f = inputs["ref_feats_f"]        # fine feats (Nf1, init_dim*4)
    src_feats_f = inputs["src_feats_f"]        # fine feats (Nf2, init_dim*4)
    gt_transform = inputs["gt_transform"]      # (4, 4)

    out = {"gt_transform": gt_transform}

    # --- fused coarse path: one pallas_call ---------------------------------
    src_nodes_gt_t = apply_transform(src_nodes, gt_transform).T   # (3, Nc2)
    (ref_ov, src_ov_t, ref_feats_c, src_feats_c,
     gt_overlap, matching_scores) = pallas_coarse_fused(
        ref_feats, src_feats, ref_compat, src_compat,
        ref_nodes, src_nodes_gt_t, params, cfg["sigma_r"])

    out["ref_patch_overlap"] = ref_ov[:, 0]
    out["src_patch_overlap"] = src_ov_t[0]
    out["ref_feats_c"] = ref_feats_c
    out["src_feats_c"] = src_feats_c
    # TODO(synk): torch.nonzero() produces data-dependent shapes; the dense
    # overlap matrix is returned instead of (indices, gathered overlaps).
    out["gt_patch_corr_overlaps"] = gt_overlap
    out["coarse_matching_scores"] = matching_scores

    # --- mutual-NN correspondence mask + weighted SVD (glue) ----------------
    matching_mask = mutual_nn_mask(matching_scores)
    corr_weights = jnp.where(matching_mask, matching_scores, 0.0)
    transform = weighted_svd_soft(src_nodes, ref_nodes, corr_weights)
    out["transform"] = transform
    out["matching_mask"] = matching_mask

    # --- fine descriptors: two calls (no HBM concat), weights pre-cast ------
    w_d, b_d = params["descriptor"]
    w_d_bf16 = w_d.astype(jnp.bfloat16)
    out["ref_desc"] = pallas_descriptor(ref_feats_f.astype(jnp.bfloat16),
                                        w_d_bf16, b_d)
    out["src_desc"] = pallas_descriptor(src_feats_f.astype(jnp.bfloat16),
                                        w_d_bf16, b_d)

    # TODO(synk): keypoint_matching, corres_embedding, consistency_filter and
    # fine_matching / refined_transform rely on undefined external submodules
    # and dynamic-shape kNN gathers; not reproduced here.
    return out


# ----------------------------------------------------------------------------
# Deterministic parameter / input construction
# ----------------------------------------------------------------------------

def _dense_init(key, fan_in, fan_out):
    kw, kb = jax.random.split(key)
    lim = 1.0 / (fan_in ** 0.5)
    w = jax.random.uniform(kw, (fan_in, fan_out), jnp.float32, -lim, lim)
    b = jax.random.uniform(kb, (fan_out,), jnp.float32, -lim, lim)
    return w, b


if __name__ == "__main__":
    cfg = dict(
        hidden_dim=32,
        output_dim=32,
        blocks=4,
        init_dim=16,
        desc_dim=16,
        sigma_r=0.3,
    )

    key = jax.random.PRNGKey(0)
    keys = jax.random.split(key, 16)

    # ---- parameters ----
    params = {
        "out_proj": _dense_init(keys[0], cfg["hidden_dim"], cfg["output_dim"]),
        "overlap_head": (
            _dense_init(keys[1], cfg["hidden_dim"] + cfg["blocks"], cfg["hidden_dim"]),
            _dense_init(keys[2], cfg["hidden_dim"], cfg["hidden_dim"]),
            _dense_init(keys[3], cfg["hidden_dim"], 1),
        ),
        "descriptor": _dense_init(keys[4], cfg["init_dim"] * 4, cfg["desc_dim"]),
    }

    # ---- synthetic inputs (backbone / transformer outputs) ----
    n_c1, n_c2 = 16, 16          # coarse nodes (points_list[2])
    n_f1, n_f2 = 32, 32          # fine points  (points_list[1])

    # ground-truth rigid transform: rotation about z + translation
    theta = 0.3
    c, s = jnp.cos(theta), jnp.sin(theta)
    gt_transform = jnp.array(
        [[c, -s, 0.0, 0.1],
         [s, c, 0.0, -0.2],
         [0.0, 0.0, 1.0, 0.05],
         [0.0, 0.0, 0.0, 1.0]], dtype=jnp.float32)

    inputs = {
        "ref_nodes": jax.random.uniform(keys[5], (n_c1, 3), jnp.float32),
        "src_nodes": jax.random.uniform(keys[6], (n_c2, 3), jnp.float32),
        "ref_feats": jax.random.normal(keys[7], (n_c1, cfg["hidden_dim"]), jnp.float32),
        "src_feats": jax.random.normal(keys[8], (n_c2, cfg["hidden_dim"]), jnp.float32),
        "ref_compat": jax.random.normal(keys[9], (n_c1, cfg["blocks"]), jnp.float32),
        "src_compat": jax.random.normal(keys[10], (n_c2, cfg["blocks"]), jnp.float32),
        "ref_feats_f": jax.random.normal(keys[11], (n_f1, cfg["init_dim"] * 4), jnp.float32),
        "src_feats_f": jax.random.normal(keys[12], (n_f2, cfg["init_dim"] * 4), jnp.float32),
        "gt_transform": gt_transform,
    }

    out = cast_forward_core(inputs, params, cfg)
    out = jax.block_until_ready(out)

    # light sanity checks
    assert out["ref_feats_c"].shape == (n_c1, cfg["output_dim"])
    assert out["coarse_matching_scores"].shape == (n_c1, n_c2)
    assert out["ref_patch_overlap"].shape == (n_c1,)
    assert out["src_patch_overlap"].shape == (n_c2,)
    assert out["gt_patch_corr_overlaps"].shape == (n_c1, n_c2)
    assert out["transform"].shape == (4, 4)
    assert out["ref_desc"].shape == (n_f1, cfg["desc_dim"])
    assert out["src_desc"].shape == (n_f2, cfg["desc_dim"])
    assert bool(jnp.all(jnp.isfinite(out["coarse_matching_scores"])))
    assert bool(jnp.all(out["ref_patch_overlap"] >= 0.0))
    assert bool(jnp.all(out["ref_patch_overlap"] <= 1.0))
    assert bool(jnp.all(out["src_patch_overlap"] >= 0.0))
    assert bool(jnp.all(out["src_patch_overlap"] <= 1.0))

    print("KERNEL_OK")
</pallas_src>

<mosaic_0001>
module attributes {stable_mosaic.version = 11 : i64} {
  func.func @_coarse_fused_kernel(%arg0: memref<32x32xbf16, #tpu.memory_space<vmem>>, %arg1: memref<32x4xf32, #tpu.memory_space<vmem>>, %arg2: memref<16x3xf32, #tpu.memory_space<vmem>>, %arg3: memref<3x16xf32, #tpu.memory_space<vmem>>, %arg4: memref<32x32xbf16, #tpu.memory_space<vmem>>, %arg5: memref<4x32xf32, #tpu.memory_space<vmem>>, %arg6: memref<1x32xf32, #tpu.memory_space<vmem>>, %arg7: memref<32x32xbf16, #tpu.memory_space<vmem>>, %arg8: memref<1x32xf32, #tpu.memory_space<vmem>>, %arg9: memref<1x32xf32, #tpu.memory_space<vmem>>, %arg10: memref<32x32xbf16, #tpu.memory_space<vmem>>, %arg11: memref<1x32xf32, #tpu.memory_space<vmem>>, %arg12: memref<1x1xf32, #tpu.memory_space<smem>>, %arg13: memref<16x1xf32, #tpu.memory_space<vmem>>, %arg14: memref<1x16xf32, #tpu.memory_space<vmem>>, %arg15: memref<16x32xf32, #tpu.memory_space<vmem>>, %arg16: memref<16x32xf32, #tpu.memory_space<vmem>>, %arg17: memref<16x16xf32, #tpu.memory_space<vmem>>, %arg18: memref<16x16xf32, #tpu.memory_space<vmem>>) attributes {dimension_semantics = [], scalar_prefetch = 0 : i64, scratch_operands = 0 : i64, tpu.core_type = #tpu.core_type<tc>} {
    %c0 = arith.constant 0 : index
    %c0_0 = arith.constant 0 : index
    %0 = vector.load %arg0[%c0, %c0_0] : memref<32x32xbf16, #tpu.memory_space<vmem>>, vector<32x32xbf16>
    %c0_1 = arith.constant 0 : index
    %c0_2 = arith.constant 0 : index
    %1 = vector.load %arg1[%c0_1, %c0_2] : memref<32x4xf32, #tpu.memory_space<vmem>>, vector<32x4xf32>
    %c0_3 = arith.constant 0 : index
    %c0_4 = arith.constant 0 : index
    %2 = vector.load %arg4[%c0_3, %c0_4] : memref<32x32xbf16, #tpu.memory_space<vmem>>, vector<32x32xbf16>
    %c0_5 = arith.constant 0 : index
    %c0_6 = arith.constant 0 : index
    %3 = vector.load %arg5[%c0_5, %c0_6] : memref<4x32xf32, #tpu.memory_space<vmem>>, vector<4x32xf32>
    %c0_7 = arith.constant 0 : index
    %c0_8 = arith.constant 0 : index
    %4 = vector.load %arg6[%c0_7, %c0_8] : memref<1x32xf32, #tpu.memory_space<vmem>>, vector<1x32xf32>
    %c0_9 = arith.constant 0 : index
    %c0_10 = arith.constant 0 : index
    %5 = vector.load %arg7[%c0_9, %c0_10] : memref<32x32xbf16, #tpu.memory_space<vmem>>, vector<32x32xbf16>
    %c0_11 = arith.constant 0 : index
    %c0_12 = arith.constant 0 : index
    %6 = vector.load %arg8[%c0_11, %c0_12] : memref<1x32xf32, #tpu.memory_space<vmem>>, vector<1x32xf32>
    %c0_13 = arith.constant 0 : index
    %c0_14 = arith.constant 0 : index
    %7 = vector.load %arg9[%c0_13, %c0_14] : memref<1x32xf32, #tpu.memory_space<vmem>>, vector<1x32xf32>
    %c0_15 = arith.constant 0 : index
    %c0_16 = arith.constant 0 : index
    %8 = memref.load %arg12[%c0_15, %c0_16] : memref<1x1xf32, #tpu.memory_space<smem>>
    %cst = arith.constant dense<0.000000e+00> : vector<32x32xf32>
    %9 = tpu.matmul %0, %2, %cst {dimension_numbers = #tpu.dot_dimension_numbers<[1], [0], [0], [1], [0, 0, 1, 1], [], []>} : vector<32x32xbf16>, vector<32x32xbf16>, vector<32x32xf32> -> vector<32x32xf32>
    %10 = vector.extract_strided_slice %1 {offsets = [0, 0], sizes = [32, 1], strides = [1, 1]} : vector<32x4xf32> to vector<32x1xf32>
    %11 = vector.extract_strided_slice %3 {offsets = [0, 0], sizes = [1, 32], strides = [1, 1]} : vector<4x32xf32> to vector<1x32xf32>
    %12 = vector.broadcast %10 : vector<32x1xf32> to vector<32x32xf32>
    %13 = vector.broadcast %11 : vector<1x32xf32> to vector<32x32xf32>
    %14 = arith.mulf %12, %13 : vector<32x32xf32>
    %15 = arith.addf %9, %14 : vector<32x32xf32>
    %16 = vector.extract_strided_slice %1 {offsets = [0, 1], sizes = [32, 1], strides = [1, 1]} : vector<32x4xf32> to vector<32x1xf32>
    %17 = vector.extract_strided_slice %3 {offsets = [1, 0], sizes = [1, 32], strides = [1, 1]} : vector<4x32xf32> to vector<1x32xf32>
    %18 = vector.broadcast %16 : vector<32x1xf32> to vector<32x32xf32>
    %19 = vector.broadcast %17 : vector<1x32xf32> to vector<32x32xf32>
    %20 = arith.mulf %18, %19 : vector<32x32xf32>
    %21 = arith.addf %15, %20 : vector<32x32xf32>
    %22 = vector.extract_strided_slice %1 {offsets = [0, 2], sizes = [32, 1], strides = [1, 1]} : vector<32x4xf32> to vector<32x1xf32>
    %23 = vector.extract_strided_slice %3 {offsets = [2, 0], sizes = [1, 32], strides = [1, 1]} : vector<4x32xf32> to vector<1x32xf32>
    %24 = vector.broadcast %22 : vector<32x1xf32> to vector<32x32xf32>
    %25 = vector.broadcast %23 : vector<1x32xf32> to vector<32x32xf32>
    %26 = arith.mulf %24, %25 : vector<32x32xf32>
    %27 = arith.addf %21, %26 : vector<32x32xf32>
    %28 = vector.extract_strided_slice %1 {offsets = [0, 3], sizes = [32, 1], strides = [1, 1]} : vector<32x4xf32> to vector<32x1xf32>
    %29 = vector.extract_strided_slice %3 {offsets = [3, 0], sizes = [1, 32], strides = [1, 1]} : vector<4x32xf32> to vector<1x32xf32>
    %30 = vector.broadcast %28 : vector<32x1xf32> to vector<32x32xf32>
    %31 = vector.broadcast %29 : vector<1x32xf32> to vector<32x32xf32>
    %32 = arith.mulf %30, %31 : vector<32x32xf32>
    %33 = arith.addf %27, %32 : vector<32x32xf32>
    %34 = vector.broadcast %4 : vector<1x32xf32> to vector<32x32xf32>
    %35 = arith.addf %33, %34 : vector<32x32xf32>
    %cst_17 = arith.constant 1.000000e-01 : f32
    %36 = vector.broadcast %cst_17 : f32 to vector<32x32xf32>
    %37 = arith.mulf %36, %35 : vector<32x32xf32>
    %38 = arith.maximumf %35, %37 : vector<32x32xf32>
    %39 = arith.truncf %38 : vector<32x32xf32> to vector<32x32xbf16>
    %cst_18 = arith.constant dense<0.000000e+00> : vector<32x32xf32>
    %40 = tpu.matmul %39, %5, %cst_18 {dimension_numbers = #tpu.dot_dimension_numbers<[1], [0], [0], [1], [0, 0, 1, 1], [], []>} : vector<32x32xbf16>, vector<32x32xbf16>, vector<32x32xf32> -> vector<32x32xf32>
    %41 = vector.broadcast %6 : vector<1x32xf32> to vector<32x32xf32>
    %42 = arith.addf %40, %41 : vector<32x32xf32>
    %cst_19 = arith.constant 1.000000e-01 : f32
    %43 = vector.broadcast %cst_19 : f32 to vector<32x32xf32>
    %44 = arith.mulf %43, %42 : vector<32x32xf32>
    %45 = arith.maximumf %42, %44 : vector<32x32xf32>
    %46 = vector.extract_strided_slice %45 {offsets = [0, 0], sizes = [16, 32], strides = [1, 1]} : vector<32x32xf32> to vector<16x32xf32>
    %47 = vector.broadcast %7 : vector<1x32xf32> to vector<16x32xf32>
    %48 = arith.mulf %46, %47 : vector<16x32xf32>
    %cst_20 = arith.constant dense<0.000000e+00> : vector<16xf32>
    %49 = vector.multi_reduction <add>, %48, %cst_20 [1] : vector<16x32xf32> to vector<16xf32>
    %50 = vector.shape_cast %49 : vector<16xf32> to vector<16x1xf32>
    %51 = vector.broadcast %8 : f32 to vector<16x1xf32>
    %52 = arith.addf %50, %51 : vector<16x1xf32>
    %53 = arith.negf %52 : vector<16x1xf32>
    %54 = math.exp %53 : vector<16x1xf32>
    %cst_21 = arith.constant 1.000000e+00 : f32
    %55 = vector.broadcast %cst_21 : f32 to vector<16x1xf32>
    %56 = arith.addf %55, %54 : vector<16x1xf32>
    %57 = arith.divf %55, %56 : vector<16x1xf32>
    %58 = vector.extract_strided_slice %45 {offsets = [16, 0], sizes = [16, 32], strides = [1, 1]} : vector<32x32xf32> to vector<16x32xf32>
    %cst_22 = arith.constant dense<0.000000e+00> : vector<1x16xf32>
    %59 = tpu.matmul %7, %58, %cst_22 {dimension_numbers = #tpu.dot_dimension_numbers<[1], [1], [0], [0], [0, 0, 1, 0], [], []>} : vector<1x32xf32>, vector<16x32xf32>, vector<1x16xf32> -> vector<1x16xf32>
    %60 = vector.broadcast %8 : f32 to vector<1x16xf32>
    %61 = arith.addf %59, %60 : vector<1x16xf32>
    %62 = arith.negf %61 : vector<1x16xf32>
    %63 = math.exp %62 : vector<1x16xf32>
    %cst_23 = arith.constant 1.000000e+00 : f32
    %64 = vector.broadcast %cst_23 : f32 to vector<1x16xf32>
    %65 = arith.addf %64, %63 : vector<1x16xf32>
    %66 = arith.divf %64, %65 : vector<1x16xf32>
    %c0_24 = arith.constant 0 : index
    %c0_25 = arith.constant 0 : index
    %67 = vector.load %arg13[%c0_24, %c0_25] : memref<16x1xf32, #tpu.memory_space<vmem>>, vector<16x1xf32>
    tpu.vector_store %arg13[%c0_24, %c0_25], %57 {strides = array<i32>} : memref<16x1xf32, #tpu.memory_space<vmem>>, vector<16x1xf32>,
    %c0_26 = arith.constant 0 : index
    %c0_27 = arith.constant 0 : index
    %68 = vector.load %arg14[%c0_26, %c0_27] : memref<1x16xf32, #tpu.memory_space<vmem>>, vector<1x16xf32>
    tpu.vector_store %arg14[%c0_26, %c0_27], %66 {strides = array<i32>} : memref<1x16xf32, #tpu.memory_space<vmem>>, vector<1x16xf32>,
    %c0_28 = arith.constant 0 : index
    %c0_29 = arith.constant 0 : index
    %69 = vector.load %arg10[%c0_28, %c0_29] : memref<32x32xbf16, #tpu.memory_space<vmem>>, vector<32x32xbf16>
    %c0_30 = arith.constant 0 : index
    %c0_31 = arith.constant 0 : index
    %70 = vector.load %arg11[%c0_30, %c0_31] : memref<1x32xf32, #tpu.memory_space<vmem>>, vector<1x32xf32>
    %cst_32 = arith.constant dense<0.000000e+00> : vector<32x32xf32>
    %71 = tpu.matmul %0, %69, %cst_32 {dimension_numbers = #tpu.dot_dimension_numbers<[1], [0], [0], [1], [0, 0, 1, 1], [], []>} : vector<32x32xbf16>, vector<32x32xbf16>, vector<32x32xf32> -> vector<32x32xf32>
    %72 = vector.broadcast %70 : vector<1x32xf32> to vector<32x32xf32>
    %73 = arith.addf %71, %72 : vector<32x32xf32>
    %74 = vector.extract_strided_slice %73 {offsets = [0, 0], sizes = [16, 32], strides = [1, 1]} : vector<32x32xf32> to vector<16x32xf32>
    %75 = vector.extract_strided_slice %73 {offsets = [16, 0], sizes = [16, 32], strides = [1, 1]} : vector<32x32xf32> to vector<16x32xf32>
    %c0_33 = arith.constant 0 : index
    %c0_34 = arith.constant 0 : index
    %76 = vector.load %arg15[%c0_33, %c0_34] : memref<16x32xf32, #tpu.memory_space<vmem>>, vector<16x32xf32>
    tpu.vector_store %arg15[%c0_33, %c0_34], %74 {strides = array<i32>} : memref<16x32xf32, #tpu.memory_space<vmem>>, vector<16x32xf32>,
    %c0_35 = arith.constant 0 : index
    %c0_36 = arith.constant 0 : index
    %77 = vector.load %arg16[%c0_35, %c0_36] : memref<16x32xf32, #tpu.memory_space<vmem>>, vector<16x32xf32>
    tpu.vector_store %arg16[%c0_35, %c0_36], %75 {strides = array<i32>} : memref<16x32xf32, #tpu.memory_space<vmem>>, vector<16x32xf32>,
    %c0_37 = arith.constant 0 : index
    %c0_38 = arith.constant 0 : index
    %78 = vector.load %arg2[%c0_37, %c0_38] : memref<16x3xf32, #tpu.memory_space<vmem>>, vector<16x3xf32>
    %c0_39 = arith.constant 0 : index
    %c0_40 = arith.constant 0 : index
    %79 = vector.load %arg3[%c0_39, %c0_40] : memref<3x16xf32, #tpu.memory_space<vmem>>, vector<3x16xf32>
    %80 = vector.extract_strided_slice %78 {offsets = [0, 0], sizes = [16, 1], strides = [1, 1]} : vector<16x3xf32> to vector<16x1xf32>
    %81 = vector.extract_strided_slice %79 {offsets = [0, 0], sizes = [1, 16], strides = [1, 1]} : vector<3x16xf32> to vector<1x16xf32>
    %82 = vector.broadcast %80 : vector<16x1xf32> to vector<16x16xf32>
    %83 = vector.broadcast %81 : vector<1x16xf32> to vector<16x16xf32>
    %84 = arith.subf %82, %83 : vector<16x16xf32>
    %85 = arith.mulf %84, %84 : vector<16x16xf32>
    %86 = vector.extract_strided_slice %78 {offsets = [0, 1], sizes = [16, 1], strides = [1, 1]} : vector<16x3xf32> to vector<16x1xf32>
    %87 = vector.extract_strided_slice %79 {offsets = [1, 0], sizes = [1, 16], strides = [1, 1]} : vector<3x16xf32> to vector<1x16xf32>
    %88 = vector.broadcast %86 : vector<16x1xf32> to vector<16x16xf32>
    %89 = vector.broadcast %87 : vector<1x16xf32> to vector<16x16xf32>
    %90 = arith.subf %88, %89 : vector<16x16xf32>
    %91 = arith.mulf %90, %90 : vector<16x16xf32>
    %92 = arith.addf %85, %91 : vector<16x16xf32>
    %93 = vector.extract_strided_slice %78 {offsets = [0, 2], sizes = [16, 1], strides = [1, 1]} : vector<16x3xf32> to vector<16x1xf32>
    %94 = vector.extract_strided_slice %79 {offsets = [2, 0], sizes = [1, 16], strides = [1, 1]} : vector<3x16xf32> to vector<1x16xf32>
    %95 = vector.broadcast %93 : vector<16x1xf32> to vector<16x16xf32>
    %96 = vector.broadcast %94 : vector<1x16xf32> to vector<16x16xf32>
    %97 = arith.subf %95, %96 : vector<16x16xf32>
    %98 = arith.mulf %97, %97 : vector<16x16xf32>
    %99 = arith.addf %92, %98 : vector<16x16xf32>
    %cst_41 = arith.constant 0.000000e+00 : f32
    %100 = vector.broadcast %cst_41 : f32 to vector<16x16xf32>
    %101 = arith.maximumf %99, %100 : vector<16x16xf32>
    %102 = math.sqrt %101 : vector<16x16xf32>
    %cst_42 = arith.constant 3.000000e-01 : f32
    %103 = vector.broadcast %cst_42 : f32 to vector<16x16xf32>
    %104 = arith.divf %102, %103 : vector<16x16xf32>
    %cst_43 = arith.constant 2.000000e+00 : f32
    %105 = vector.broadcast %cst_43 : f32 to vector<16x16xf32>
    %106 = arith.minimumf %104, %105 : vector<16x16xf32>
    %107 = arith.mulf %106, %106 : vector<16x16xf32>
    %108 = arith.mulf %107, %106 : vector<16x16xf32>
    %cst_44 = arith.constant 1.600000e+01 : f32
    %109 = vector.broadcast %cst_44 : f32 to vector<16x16xf32>
    %110 = arith.divf %108, %109 : vector<16x16xf32>
    %cst_45 = arith.constant 1.000000e+00 : f32
    %111 = vector.broadcast %cst_45 : f32 to vector<16x16xf32>
    %112 = arith.addf %111, %110 : vector<16x16xf32>
    %cst_46 = arith.constant 7.500000e-01 : f32
    %113 = vector.broadcast %cst_46 : f32 to vector<16x16xf32>
    %114 = arith.mulf %113, %106 : vector<16x16xf32>
    %115 = arith.subf %112, %114 : vector<16x16xf32>
    %cst_47 = arith.constant 0.000000e+00 : f32
    %116 = vector.broadcast %cst_47 : f32 to vector<16x16xf32>
    %117 = arith.maximumf %115, %116 : vector<16x16xf32>
    %c0_48 = arith.constant 0 : index
    %c0_49 = arith.constant 0 : index
    %118 = vector.load %arg17[%c0_48, %c0_49] : memref<16x16xf32, #tpu.memory_space<vmem>>, vector<16x16xf32>
    tpu.vector_store %arg17[%c0_48, %c0_49], %117 {strides = array<i32>} : memref<16x16xf32, #tpu.memory_space<vmem>>, vector<16x16xf32>,
    %cst_50 = arith.constant 0.176776692 : f32
    %119 = vector.broadcast %cst_50 : f32 to vector<16x32xf32>
    %120 = arith.mulf %74, %119 : vector<16x32xf32>
    %121 = arith.truncf %120 : vector<16x32xf32> to vector<16x32xbf16>
    %122 = arith.truncf %75 : vector<16x32xf32> to vector<16x32xbf16>
    %cst_51 = arith.constant dense<0.000000e+00> : vector<16x16xf32>
    %123 = tpu.matmul %121, %122, %cst_51 {dimension_numbers = #tpu.dot_dimension_numbers<[1], [1], [0], [0], [0, 0, 1, 0], [], []>} : vector<16x32xbf16>, vector<16x32xbf16>, vector<16x16xf32> -> vector<16x16xf32>
    %cst_52 = arith.constant dense<0xFF800000> : vector<16xf32>
    %124 = vector.multi_reduction <maximumf>, %123, %cst_52 [1] : vector<16x16xf32> to vector<16xf32>
    %125 = vector.shape_cast %124 : vector<16xf32> to vector<16x1xf32>
    %cst_53 = arith.constant dense<0xFF800000> : vector<1xf32>
    %126 = vector.multi_reduction <maximumf>, %125, %cst_53 [0] : vector<16x1xf32> to vector<1xf32>
    %127 = vector.shape_cast %126 : vector<1xf32> to vector<1x1xf32>
    %128 = vector.broadcast %125 : vector<16x1xf32> to vector<16x16xf32>
    %129 = arith.subf %123, %128 : vector<16x16xf32>
    %130 = math.exp %129 : vector<16x16xf32>
    %131 = vector.broadcast %127 : vector<1x1xf32> to vector<16x1xf32>
    %132 = arith.subf %125, %131 : vector<16x1xf32>
    %133 = math.exp %132 : vector<16x1xf32>
    %134 = vector.broadcast %133 : vector<16x1xf32> to vector<16x16xf32>
    %135 = arith.mulf %130, %134 : vector<16x16xf32>
    %cst_54 = arith.constant dense<0.000000e+00> : vector<16xf32>
    %136 = vector.multi_reduction <add>, %130, %cst_54 [1] : vector<16x16xf32> to vector<16xf32>
    %137 = vector.shape_cast %136 : vector<16xf32> to vector<16x1xf32>
    %cst_55 = arith.constant dense<0.000000e+00> : vector<16xf32>
    %138 = vector.multi_reduction <add>, %135, %cst_55 [0] : vector<16x16xf32> to vector<16xf32>
    %139 = vector.shape_cast %138 : vector<16xf32> to vector<1x16xf32>
    %140 = tpu.reciprocal %137 {approx = true} : vector<16x1xf32> -> vector<16x1xf32>
    %141 = arith.mulf %140, %57 : vector<16x1xf32>
    %cst_56 = arith.constant 1.000000e-30 : f32
    %142 = vector.broadcast %cst_56 : f32 to vector<1x16xf32>
    %143 = arith.addf %139, %142 : vector<1x16xf32>
    %144 = tpu.reciprocal %143 {approx = true} : vector<1x16xf32> -> vector<1x16xf32>
    %145 = arith.mulf %144, %66 : vector<1x16xf32>
    %146 = vector.broadcast %141 : vector<16x1xf32> to vector<16x16xf32>
    %147 = arith.mulf %130, %146 : vector<16x16xf32>
    %148 = vector.broadcast %145 : vector<1x16xf32> to vector<16x16xf32>
    %149 = arith.mulf %135, %148 : vector<16x16xf32>
    %150 = arith.mulf %147, %149 : vector<16x16xf32>
    %c0_57 = arith.constant 0 : index
    %c0_58 = arith.constant 0 : index
    %151 = vector.load %arg18[%c0_57, %c0_58] : memref<16x16xf32, #tpu.memory_space<vmem>>, vector<16x16xf32>
    tpu.vector_store %arg18[%c0_57, %c0_58], %150 {strides = array<i32>} : memref<16x16xf32, #tpu.memory_space<vmem>>, vector<16x16xf32>,
    return
  }
}

</mosaic_0001>

<llo_original>
// kernel: tpu_custom_call.1
$region0: #{tpu_custom_call.1}
  #allocation0 [shape = 'u32[]', space=smem, size = 0x4, offset = 0x4, fixed_abs, tag = 'smem constant byte address 0x4 - core index']
  #allocation1 [shape = 'u32[144,128]{1,0:T(1,128)}', space=vmem, size = 0x12000, scoped, tag = 'internal scratch']
  #allocation2 [shape = 'f32[1,1]{1,0:T(1,128)S(6)}', space=smem, size = 0x200, scoped, tag = 'scoped memory for tpu_custom_call.1']
  %s0 = inlined_call_operand.vmem [shape: bf16[32,32], index: 0, kind: input, shape index: {}]
  %s1 = inlined_call_operand.vmem [shape: f32[32,4], index: 1, kind: input, shape index: {}]
  %s2 = inlined_call_operand.vmem [shape: f32[16,3], index: 2, kind: input, shape index: {}]
  %s3 = inlined_call_operand.vmem [shape: f32[3,16], index: 3, kind: input, shape index: {}]
  %s4 = inlined_call_operand.vmem [shape: bf16[32,32], index: 4, kind: input, shape index: {}]
  %s5 = inlined_call_operand.vmem [shape: f32[4,32], index: 5, kind: input, shape index: {}]
  %s6 = inlined_call_operand.vmem [shape: f32[1,32], index: 6, kind: input, shape index: {}]
  %s7 = inlined_call_operand.vmem [shape: bf16[32,32], index: 7, kind: input, shape index: {}]
  %s8 = inlined_call_operand.vmem [shape: f32[1,32], index: 8, kind: input, shape index: {}]
  %s9 = inlined_call_operand.vmem [shape: f32[1,32], index: 9, kind: input, shape index: {}]
  %s10 = inlined_call_operand.vmem [shape: bf16[32,32], index: 10, kind: input, shape index: {}]
  %s11 = inlined_call_operand.vmem [shape: f32[1,32], index: 11, kind: input, shape index: {}]
  %s12 = inlined_call_operand.<no memory space> [shape: f32[1,1], index: 12, kind: input, shape index: {}]
  %s13 = inlined_call_operand.vmem [shape: f32[16,1], index: 13, kind: output, shape index: {0}]
  %s14 = inlined_call_operand.hbm [shape: f32[1,16], index: 14, kind: output, shape index: {1}]
  %s15 = inlined_call_operand.hbm [shape: f32[16,32], index: 15, kind: output, shape index: {2}]
  %s16 = inlined_call_operand.hbm [shape: f32[16,32], index: 16, kind: output, shape index: {3}]
  %s17 = inlined_call_operand.hbm [shape: f32[16,16], index: 17, kind: output, shape index: {4}]
  %s18 = inlined_call_operand.hbm [shape: f32[16,16], index: 18, kind: output, shape index: {5}]
  %19 = xla_tuple %s13, %s14, %s15, %s16, %s17, %s18
  %s20 = sld [smem:[#allocation0]]
  $region102: #{tpu_custom_call.1} parent=0
    _
  %s22 = ssub.s32 1, %s20
  %s23 = scalar_select 0, %s22, %s20
  %24 = sst [smem:[#allocation2]] %s12
  $region1: #{tpu_custom_call.1} parent=0
    #allocation3 [shape = 'u8[512]{0}', space=vmem, size = 0x400, scoped, tag = 'output window, operand 1, single buffered']
    #allocation4 [shape = 's32[1]{0}', space=sflag, size = 0x4, scoped, tag = 'scoped memory for tpu_custom_call.1']
    #allocation5 [shape = 'u8[8192]{0}', space=vmem, size = 0x2000, scoped, tag = 'output window, operand 2, single buffered']
    #allocation6 [shape = 's32[1]{0}', space=sflag, size = 0x4, scoped, tag = 'scoped memory for tpu_custom_call.1']
    #allocation7 [shape = 'u8[8192]{0}', space=vmem, size = 0x2000, scoped, tag = 'output window, operand 3, single buffered']
    #allocation8 [shape = 'u8[8192]{0}', space=vmem, size = 0x2000, scoped, tag = 'output window, operand 4, single buffered']
    #allocation9 [shape = 's32[1]{0}', space=sflag, size = 0x4, scoped, tag = 'scoped memory for tpu_custom_call.1']
    #allocation10 [shape = 'u8[8192]{0}', space=vmem, size = 0x2000, scoped, tag = 'output window, operand 5, single buffered']
    %25 = vsyncpa [#allocation4], 0
    %26 = vsyncpa [#allocation6], 0
    %27 = vsyncpa [#allocation9], 0
    // Predicated region
    $region2: #{tpu_custom_call.1} parent=1 // pred_check
      _
    $region3: #{tpu_custom_call.1} parent=1 // pred_check_branch
      %29 = sbr.rel (0) target = $region5
    $region4: #{tpu_custom_call.1} parent=1 // pred_region
      _
    $region5: #{tpu_custom_call.1} parent=1 // pred_fallthru
      _
    // Predicated region
    $region6: #{tpu_custom_call.1} parent=1 // pred_check
      _
    $region7: #{tpu_custom_call.1} parent=1 // pred_check_branch
      %31 = sbr.rel (0) target = $region9
    $region8: #{tpu_custom_call.1} parent=1 // pred_region
      _
    $region9: #{tpu_custom_call.1} parent=1 // pred_fallthru
      _
    // Predicated region
    $region10: #{tpu_custom_call.1} parent=1 // pred_check
      _
    $region11: #{tpu_custom_call.1} parent=1 // pred_check_branch
      %33 = sbr.rel (0) target = $region13
    $region12: #{tpu_custom_call.1} parent=1 // pred_region
      _
    $region13: #{tpu_custom_call.1} parent=1 // pred_fallthru
      _
    // Predicated region
    $region14: #{tpu_custom_call.1} parent=1 // pred_check
      _
    $region15: #{tpu_custom_call.1} parent=1 // pred_check_branch
      %35 = sbr.rel (0) target = $region17
    $region16: #{tpu_custom_call.1} parent=1 // pred_region
      _
    $region17: #{tpu_custom_call.1} parent=1 // pred_fallthru
      _
    // Predicated region
    $region18: #{tpu_custom_call.1} parent=1 // pred_check
      _
    $region19: #{tpu_custom_call.1} parent=1 // pred_check_branch
      %37 = sbr.rel (0) target = $region21
    $region20: #{tpu_custom_call.1} parent=1 // pred_region
      _
    $region21: #{tpu_custom_call.1} parent=1 // pred_fallthru
      _
    // Predicated region
    $region22: #{tpu_custom_call.1} parent=1 // pred_check
      _
    $region23: #{tpu_custom_call.1} parent=1 // pred_check_branch
      %39 = sbr.rel (0) target = $region25
    $region24: #{tpu_custom_call.1} parent=1 // pred_region
      _
    $region25: #{tpu_custom_call.1} parent=1 // pred_fallthru
      _
    // Predicated region
    $region26: #{tpu_custom_call.1} parent=1 // pred_check
      _
    $region27: #{tpu_custom_call.1} parent=1 // pred_check_branch
      %41 = sbr.rel (0) target = $region29
    $region28: #{tpu_custom_call.1} parent=1 // pred_region
      _
    $region29: #{tpu_custom_call.1} parent=1 // pred_fallthru
      _
    // Predicated region
    $region30: #{tpu_custom_call.1} parent=1 // pred_check
      _
    $region31: #{tpu_custom_call.1} parent=1 // pred_check_branch
      %43 = sbr.rel (0) target = $region33
    $region32: #{tpu_custom_call.1} parent=1 // pred_region
      _
    $region33: #{tpu_custom_call.1} parent=1 // pred_fallthru
      _
    // Predicated region
    $region34: #{tpu_custom_call.1} parent=1 // pred_check
      _
    $region35: #{tpu_custom_call.1} parent=1 // pred_check_branch
      %45 = sbr.rel (0) target = $region37
    $region36: #{tpu_custom_call.1} parent=1 // pred_region
      _
    $region37: #{tpu_custom_call.1} parent=1 // pred_fallthru
      _
    // Predicated region
    $region38: #{tpu_custom_call.1} parent=1 // pred_check
      _
    $region39: #{tpu_custom_call.1} parent=1 // pred_check_branch
      %47 = sbr.rel (0) target = $region41
    $region40: #{tpu_custom_call.1} parent=1 // pred_region
      _
    $region41: #{tpu_custom_call.1} parent=1 // pred_fallthru
      _
    // Predicated region
    $region42: #{tpu_custom_call.1} parent=1 // pred_check
      _
    $region43: #{tpu_custom_call.1} parent=1 // pred_check_branch
      %49 = sbr.rel (0) target = $region45
    $region44: #{tpu_custom_call.1} parent=1 // pred_region
      _
    $region45: #{tpu_custom_call.1} parent=1 // pred_fallthru
      _
    // Predicated region
    $region46: #{tpu_custom_call.1} parent=1 // pred_check
      _
    $region47: #{tpu_custom_call.1} parent=1 // pred_check_branch
      %51 = sbr.rel (0) target = $region49
    $region48: #{tpu_custom_call.1} parent=1 // pred_region
      _
    $region49: #{tpu_custom_call.1} parent=1 // pred_fallthru
      _
    // Predicated region
    $region50: #{tpu_custom_call.1} parent=1 // pred_check
      _
    $region51: #{tpu_custom_call.1} parent=1 // pred_check_branch
      %53 = sbr.rel (0) target = $region53
    $region52: #{tpu_custom_call.1} parent=1 // pred_region
      _
    $region53: #{tpu_custom_call.1} parent=1 // pred_fallthru
      _
    %v55 = vld [vmem:[%s0] sm:$0xf]
    %v56 = vld [vmem:[%s0 + $0x4] sm:$0xf]
    %v57 = vld [vmem:[%s0 + $0x8] sm:$0xf]
    %v58 = vld [vmem:[%s0 + $0xc] sm:$0xf]
    %v59 = vld [vmem:[%s1] sm:$0xff]
    %v60 = vld [vmem:[%s1 + $0x8] sm:$0xff]
    %v61 = vld [vmem:[%s1 + $0x10] sm:$0xff]
    %v62 = vld [vmem:[%s1 + $0x18] sm:$0xff]
    %v63 = vld [vmem:[%s4] sm:$0xf]
    %v64 = vld [vmem:[%s4 + $0x4] sm:$0xf]
    %v65 = vld [vmem:[%s4 + $0x8] sm:$0xf]
    %v66 = vld [vmem:[%s4 + $0xc] sm:$0xf]
    %v67 = vld [vmem:[%s5] sm:$0xf]
    %v68 = vld [vmem:[%s6] sm:$0x1]
    %v69 = vld [vmem:[%s7] sm:$0xf]
    %v70 = vld [vmem:[%s7 + $0x4] sm:$0xf]
    %v71 = vld [vmem:[%s7 + $0x8] sm:$0xf]
    %v72 = vld [vmem:[%s7 + $0xc] sm:$0xf]
    %v73 = vld [vmem:[%s8] sm:$0x1]
    %v74 = vld [vmem:[%s9] sm:$0x1]
    %s75 = sld [smem:[#allocation2]]
    %77 = vset.pattern.permute.xlu0 0
    %78 = vperm.xlu0 %77, %v59
    %v79 = vpop.permute.xlu0 %78
    %82 = vset.pattern.permute.xlu0 0
    %83 = vperm.xlu0 %82, %v60
    %v84 = vpop.permute.xlu0 %83
    %87 = vset.pattern.permute.xlu0 0
    %88 = vperm.xlu0 %87, %v61
    %v89 = vpop.permute.xlu0 %88
    %92 = vset.pattern.permute.xlu0 0
    %93 = vperm.xlu0 %92, %v62
    %v94 = vpop.permute.xlu0 %93
    %v96 = vlaneseq
    %v97 = vshrl.u32 %v96, 7
    %v98 = vsub.s32 0, %v97
    %v99 = vrot.slane %v67, %v98
    %v100 = vmul.f32 %v79, %v99
    %v101 = vmul.f32 %v84, %v99
    %v102 = vmul.f32 %v89, %v99
    %v103 = vmul.f32 %v94, %v99
    %v108 = vunpack.c.l.b16 %v55
    %v109 = vunpack.c.l.b16 %v56
    %v110 = vunpack.c.l.b16 %v57
    %v111 = vunpack.c.l.b16 %v58
    %v112 = vpack.c.b16 %v109, %v108
    %v113 = vpack.c.b16 %v111, %v110
    %v118 = vunpack.c.l.b16 %v63
    %v119 = vunpack.c.l.b16 %v64
    %v120 = vunpack.c.l.b16 %v65
    %v121 = vunpack.c.l.b16 %v66
    %v122 = vpack.c.b16 %v119, %v118
    %v123 = vpack.c.b16 %v121, %v120
    %vm126 = vcmask 261120
    %v128 = vsel %vm126, %v112, 0
    %v131 = vsel %vm126, %v113, 0
    %133 = vmatprep.subr.bf16.mxu0 0
    %134 = vmatpush1.bf16.msra.mxu0 %v122
    %135 = vmatprep.subr.bf16.mxu0 0
    %136 = vmatpush1.bf16.msra.mxu0 %v123
    %137 = vmatprep.subr.bf16.mxu0 0
    %138 = vmatpush1.bf16.msra.mxu0 0
    %139 = vmatprep.subr.bf16.mxu0 0
    %140 = vmatpush1.bf16.msra.mxu0 0
    %141 = vmatprep.subr.bf16.mxu0 0
    %142 = vmatpush1.bf16.msra.mxu0 0
    %143 = vmatprep.subr.bf16.mxu0 0
    %144 = vmatpush1.bf16.msra.mxu0 0
    %145 = vmatprep.subr.bf16.mxu0 0
    %146 = vmatpush1.bf16.msra.mxu0 0
    %147 = vmatprep.subr.bf16.mxu0 0
    %148 = vmatpush1.bf16.msra.mxu0 0
    %149 = vmatprep.subr.bf16.mxu0 0
    %150 = vmatpush1.bf16.msra.mxu0 0
    %151 = vmatprep.subr.bf16.mxu0 0
    %152 = vmatpush1.bf16.msra.mxu0 0
    %153 = vmatprep.subr.bf16.mxu0 0
    %154 = vmatpush1.bf16.msra.mxu0 0
    %155 = vmatprep.subr.bf16.mxu0 0
    %156 = vmatpush1.bf16.msra.mxu0 0
    %157 = vmatprep.subr.bf16.mxu0 0
    %158 = vmatpush1.bf16.msra.mxu0 0
    %159 = vmatprep.subr.bf16.mxu0 0
    %160 = vmatpush1.bf16.msra.mxu0 0
    %161 = vmatprep.subr.bf16.mxu0 0
    %162 = vmatpush1.bf16.msra.mxu0 0
    %163 = vmatprep.subr.bf16.mxu0 0
    %164 = vmatpush1.bf16.msra.mxu0 0
    %165 = vmatprep.mubr.bf16.mxu0 0
    %166 = vmatmul.mubr.bf16.gmra.mrb[0].mxu0 %v128
    %v167 = vpop.f32.mrb[0].mxu0
    %v168 = vadd.f32 %v100, %v167
    %v169 = vpop.f32.mrb[0].mxu0
    %v170 = vpop.f32.mrb[0].mxu0
    %v171 = vadd.f32 %v101, %v170
    %v172 = vpop.f32.mrb[0].mxu0
    %173 = vmatprep.mubr.bf16.mxu0 0
    %174 = vmatmul.mubr.bf16.gmra.mrb[0].mxu0 %v131
    %v175 = vpop.f32.mrb[0].mxu0
    %v176 = vadd.f32 %v102, %v175
    %v177 = vpop.f32.mrb[0].mxu0
    %v178 = vpop.f32.mrb[0].mxu0
    %v179 = vadd.f32 %v103, %v178
    %v180 = vpop.f32.mrb[0].mxu0
    %181 = vdwg.mxu0
    %182 = vset.pattern.permute.xlu0 1
    %183 = vperm.xlu0 %182, %v59
    %v184 = vpop.permute.xlu0 %183
    %186 = vset.pattern.permute.xlu0 1
    %187 = vperm.xlu0 %186, %v60
    %v188 = vpop.permute.xlu0 %187
    %190 = vset.pattern.permute.xlu0 1
    %191 = vperm.xlu0 %190, %v61
    %v192 = vpop.permute.xlu0 %191
    %194 = vset.pattern.permute.xlu0 1
    %195 = vperm.xlu0 %194, %v62
    %v196 = vpop.permute.xlu0 %195
    %v198 = vlaneseq
    %v199 = vshrl.u32 %v198, 7
    %v200 = vsub.s32 1, %v199
    %v201 = vrot.slane %v67, %v200
    %v202 = vmul.f32 %v184, %v201
    %v203 = vmul.f32 %v188, %v201
    %v204 = vmul.f32 %v192, %v201
    %v205 = vmul.f32 %v196, %v201
    %v206 = vadd.f32 %v168, %v202
    %v207 = vadd.f32 %v171, %v203
    %v208 = vadd.f32 %v176, %v204
    %v209 = vadd.f32 %v179, %v205
    %210 = vset.pattern.permute.xlu0 2
    %211 = vperm.xlu0 %210, %v59
    %v212 = vpop.permute.xlu0 %211
    %214 = vset.pattern.permute.xlu0 2
    %215 = vperm.xlu0 %214, %v60
    %v216 = vpop.permute.xlu0 %215
    %218 = vset.pattern.permute.xlu0 2
    %219 = vperm.xlu0 %218, %v61
    %v220 = vpop.permute.xlu0 %219
    %222 = vset.pattern.permute.xlu0 2
    %223 = vperm.xlu0 %222, %v62
    %v224 = vpop.permute.xlu0 %223
    %v226 = vlaneseq
    %v227 = vshrl.u32 %v226, 7
    %v228 = vsub.s32 2, %v227
    %v229 = vrot.slane %v67, %v228
    %v230 = vmul.f32 %v212, %v229
    %v231 = vmul.f32 %v216, %v229
    %v232 = vmul.f32 %v220, %v229
    %v233 = vmul.f32 %v224, %v229
    %v234 = vadd.f32 %v206, %v230
    %v235 = vadd.f32 %v207, %v231
    %v236 = vadd.f32 %v208, %v232
    %v237 = vadd.f32 %v209, %v233
    %238 = vset.pattern.permute.xlu0 3
    %239 = vperm.xlu0 %238, %v59
    %v240 = vpop.permute.xlu0 %239
    %242 = vset.pattern.permute.xlu0 3
    %243 = vperm.xlu0 %242, %v60
    %v244 = vpop.permute.xlu0 %243
    %246 = vset.pattern.permute.xlu0 3
    %247 = vperm.xlu0 %246, %v61
    %v248 = vpop.permute.xlu0 %247
    %250 = vset.pattern.permute.xlu0 3
    %251 = vperm.xlu0 %250, %v62
    %v252 = vpop.permute.xlu0 %251
    %v254 = vlaneseq
    %v255 = vshrl.u32 %v254, 7
    %v256 = vsub.s32 3, %v255
    %v257 = vrot.slane %v67, %v256
    %v258 = vmul.f32 %v240, %v257
    %v259 = vmul.f32 %v244, %v257
    %v260 = vmul.f32 %v248, %v257
    %v261 = vmul.f32 %v252, %v257
    %v262 = vadd.f32 %v234, %v258
    %v263 = vadd.f32 %v235, %v259
    %v264 = vadd.f32 %v236, %v260
    %v265 = vadd.f32 %v237, %v261
    %v267 = vlaneseq
    %v268 = vshrl.u32 %v267, 7
    %v269 = vsub.s32 0, %v268
    %v270 = vrot.slane %v68, %v269
    %v272 = vadd.f32 %v262, %v270
    %v273 = vadd.f32 %v263, %v270
    %v274 = vadd.f32 %v264, %v270
    %v275 = vadd.f32 %v265, %v270
    %v276 = vmul.f32 %v272, 0.1
    %v277 = vmul.f32 %v273, 0.1
    %v278 = vmul.f32 %v274, 0.1
    %v279 = vmul.f32 %v275, 0.1
    %v280 = vmax.f32 %v272, %v276
    %v281 = vmax.f32 %v273, %v277
    %v282 = vmax.f32 %v274, %v278
    %v283 = vmax.f32 %v275, %v279
    %v284 = vpack.c.bf16 %v281, %v280
    %v285 = vpack.c.bf16 %v283, %v282
    %v287 = vlaneseq
    %v288 = vshrl.u32 %v287, 7
    %v289 = vsub.s32 0, %v288
    %v290 = vrot.slane %v73, %v289
    %v296 = vunpack.c.l.b16 %v69
    %v297 = vunpack.c.l.b16 %v70
    %v298 = vunpack.c.l.b16 %v71
    %v299 = vunpack.c.l.b16 %v72
    %v300 = vpack.c.b16 %v297, %v296
    %v301 = vpack.c.b16 %v299, %v298
    %v305 = vsel %vm126, %v284, 0
    %v308 = vsel %vm126, %v285, 0
    %310 = vmatprep.subr.bf16.mxu0 0
    %311 = vmatpush1.bf16.msra.mxu0 %v300
    %312 = vmatprep.subr.bf16.mxu0 0
    %313 = vmatpush1.bf16.msra.mxu0 %v301
    %314 = vmatprep.subr.bf16.mxu0 0
    %315 = vmatpush1.bf16.msra.mxu0 0
    %316 = vmatprep.subr.bf16.mxu0 0
    %317 = vmatpush1.bf16.msra.mxu0 0
    %318 = vmatprep.subr.bf16.mxu0 0
    %319 = vmatpush1.bf16.msra.mxu0 0
    %320 = vmatprep.subr.bf16.mxu0 0
    %321 = vmatpush1.bf16.msra.mxu0 0
    %322 = vmatprep.subr.bf16.mxu0 0
    %323 = vmatpush1.bf16.msra.mxu0 0
    %324 = vmatprep.subr.bf16.mxu0 0
    %325 = vmatpush1.bf16.msra.mxu0 0
    %326 = vmatprep.subr.bf16.mxu0 0
    %327 = vmatpush1.bf16.msra.mxu0 0
    %328 = vmatprep.subr.bf16.mxu0 0
    %329 = vmatpush1.bf16.msra.mxu0 0
    %330 = vmatprep.subr.bf16.mxu0 0
    %331 = vmatpush1.bf16.msra.mxu0 0
    %332 = vmatprep.subr.bf16.mxu0 0
    %333 = vmatpush1.bf16.msra.mxu0 0
    %334 = vmatprep.subr.bf16.mxu0 0
    %335 = vmatpush1.bf16.msra.mxu0 0
    %336 = vmatprep.subr.bf16.mxu0 0
    %337 = vmatpush1.bf16.msra.mxu0 0
    %338 = vmatprep.subr.bf16.mxu0 0
    %339 = vmatpush1.bf16.msra.mxu0 0
    %340 = vmatprep.subr.bf16.mxu0 0
    %341 = vmatpush1.bf16.msra.mxu0 0
    %342 = vmatprep.mubr.bf16.mxu0 0
    %343 = vmatmul.mubr.bf16.gmra.mrb[0].mxu0 %v305
    %v344 = vpop.f32.mrb[0].mxu0
    %v345 = vadd.f32 %v290, %v344
    %v346 = vpop.f32.mrb[0].mxu0
    %v347 = vpop.f32.mrb[0].mxu0
    %v348 = vadd.f32 %v290, %v347
    %v349 = vpop.f32.mrb[0].mxu0
    %350 = vmatprep.mubr.bf16.mxu0 0
    %351 = vmatmul.mubr.bf16.gmra.mrb[0].mxu0 %v308
    %v352 = vpop.f32.mrb[0].mxu0
    %v353 = vadd.f32 %v290, %v352
    %v354 = vpop.f32.mrb[0].mxu0
    %v355 = vpop.f32.mrb[0].mxu0
    %v356 = vadd.f32 %v290, %v355
    %v357 = vpop.f32.mrb[0].mxu0
    %358 = vdwg.mxu0
    %v359 = vmul.f32 %v345, 0.1
    %v360 = vmul.f32 %v348, 0.1
    %v361 = vmul.f32 %v353, 0.1
    %v362 = vmul.f32 %v356, 0.1
    %v363 = vmax.f32 %v345, %v359
    %v364 = vmax.f32 %v348, %v360
    %v365 = vmax.f32 %v353, %v361
    %v366 = vmax.f32 %v356, %v362
    %v368 = vlaneseq
    %v369 = vshrl.u32 %v368, 7
    %v370 = vsub.s32 0, %v369
    %v371 = vrot.slane %v74, %v370
    %v373 = vmul.f32 %v363, %v371
    %v374 = vmul.f32 %v364, %v371
    %v375 = vsel %vm126, %v373, 0.0
    %376 = vadd.xlane.f32.xlu0 %v375
    %v377 = vpop.xlane.xlu0 %376
    %v378 = vsel %vm126, %v374, 0.0
    %379 = vadd.xlane.f32.xlu0 %v378
    %v380 = vpop.xlane.xlu0 %379
    %v381 = vstv %s75
    %v382 = vadd.f32 %v377, %v381
    %v383 = vadd.f32 %v380, %v381
    %v384 = vxor.u32 %v382, 2147483648
    %v385 = vxor.u32 %v383, 2147483648
    %v386 = vmul.f32 %v384, 1.442695
    %v387 = vpow.pop %v386
    %v388 = vmul.f32 %v385, 1.442695
    %v389 = vpow.pop %v388
    %v390 = vadd.f32 %v387, 1.0
    %v391 = vadd.f32 %v389, 1.0
    %v392 = vrcp.pop %v390
    %v393 = vmul.f32 1.0, %v392
    %v394 = vrcp.pop %v391
    %v395 = vmul.f32 1.0, %v394
    %v396 = vsel %vm126, %v74, 0
    %v399 = vsel %vm126, %v365, 0
    %v402 = vsel %vm126, %v366, 0
    %404 = vmatprep.subr.mxu0 0.0
    %405 = vmatpush1.xpose.msra.mxu0 %v399
    %406 = vmatprep.subr.mxu0 0.0
    %407 = vmatpush1.xpose.msra.mxu0 %v402
    %408 = vmatprep.subr.mxu0 0.0
    %409 = vmatpush1.xpose.msra.mxu0 0.0
    %410 = vmatprep.subr.mxu0 0.0
    %411 = vmatpush1.xpose.msra.mxu0 0.0
    %412 = vmatprep.subr.mxu0 0.0
    %413 = vmatpush1.xpose.msra.mxu0 0.0
    %414 = vmatprep.subr.mxu0 0.0
    %415 = vmatpush1.xpose.msra.mxu0 0.0
    %416 = vmatprep.subr.mxu0 0.0
    %417 = vmatpush1.xpose.msra.mxu0 0.0
    %418 = vmatprep.subr.mxu0 0.0
    %419 = vmatpush1.xpose.msra.mxu0 0.0
    %420 = vmatprep.subr.mxu0 0.0
    %421 = vmatpush1.xpose.msra.mxu0 0.0
    %422 = vmatprep.subr.mxu0 0.0
    %423 = vmatpush1.xpose.msra.mxu0 0.0
    %424 = vmatprep.subr.mxu0 0.0
    %425 = vmatpush1.xpose.msra.mxu0 0.0
    %426 = vmatprep.subr.mxu0 0.0
    %427 = vmatpush1.xpose.msra.mxu0 0.0
    %428 = vmatprep.subr.mxu0 0.0
    %429 = vmatpush1.xpose.msra.mxu0 0.0
    %430 = vmatprep.subr.mxu0 0.0
    %431 = vmatpush1.xpose.msra.mxu0 0.0
    %432 = vmatprep.subr.mxu0 0.0
    %433 = vmatpush1.xpose.msra.mxu0 0.0
    %434 = vmatprep.subr.mxu0 0.0
    %435 = vmatpush1.xpose.msra.mxu0 0.0
    %436 = vmatprep.subr.mxu0 0.0
    %437 = vmatpush1.xpose.msra.mxu0 0.0
    %438 = vmatprep.subr.mxu0 0.0
    %439 = vmatpush1.xpose.msra.mxu0 0.0
    %440 = vmatprep.subr.mxu0 0.0
    %441 = vmatpush1.xpose.msra.mxu0 0.0
    %442 = vmatprep.subr.mxu0 0.0
    %443 = vmatpush1.xpose.msra.mxu0 0.0
    %444 = vmatprep.subr.mxu0 0.0
    %445 = vmatpush1.xpose.msra.mxu0 0.0
    %446 = vmatprep.subr.mxu0 0.0
    %447 = vmatpush1.xpose.msra.mxu0 0.0
    %448 = vmatprep.subr.mxu0 0.0
    %449 = vmatpush1.xpose.msra.mxu0 0.0
    %450 = vmatprep.subr.mxu0 0.0
    %451 = vmatpush1.xpose.msra.mxu0 0.0
    %452 = vmatprep.subr.mxu0 0.0
    %453 = vmatpush1.xpose.msra.mxu0 0.0
    %454 = vmatprep.subr.mxu0 0.0
    %455 = vmatpush1.xpose.msra.mxu0 0.0
    %456 = vmatprep.subr.mxu0 0.0
    %457 = vmatpush1.xpose.msra.mxu0 0.0
    %458 = vmatprep.subr.mxu0 0.0
    %459 = vmatpush1.xpose.msra.mxu0 0.0
    %460 = vmatprep.subr.mxu0 0.0
    %461 = vmatpush1.xpose.msra.mxu0 0.0
    %462 = vmatprep.subr.mxu0 0.0
    %463 = vmatpush1.xpose.msra.mxu0 0.0
    %464 = vmatprep.subr.mxu0 0.0
    %465 = vmatpush1.xpose.msra.mxu0 0.0
    %466 = vmatprep.subr.mxu0 0.0
    %467 = vmatpush1.xpose.msra.mxu0 0.0
    %468 = vmatprep.mubr.f32.mxu0 0.0
    %469 = vmatmul.mubr.f32.gmra.mrb[0].mxu0 %v396
    %v470 = vpop.f32.mrb[0].mxu0
    %v471 = vadd.f32 %v381, %v470
    %v472 = vpop.f32.mrb[0].mxu0
    %473 = vdwg.mxu0
    %v474 = vxor.u32 %v471, 2147483648
    %v475 = vmul.f32 %v474, 1.442695
    %v476 = vpow.pop %v475
    %v477 = vadd.f32 %v476, 1.0
    %v478 = vrcp.pop %v477
    %v479 = vmul.f32 1.0, %v478
    %vm480 = vcmask 7168
    %481 = vst.msk [vmem:[%s13] sm:$0xff] %vm480, %v393
    %482 = vst.msk [vmem:[%s13 + $0x8] sm:$0xff] %vm480, %v395
    %vm483 = vcmask 122880
    %484 = vst.msk [vmem:[#allocation3] sm:$0x1] %vm483, %v479
    %v485 = vld [vmem:[%s10] sm:$0xf]
    %v486 = vld [vmem:[%s10 + $0x4] sm:$0xf]
    %v487 = vld [vmem:[%s10 + $0x8] sm:$0xf]
    %v488 = vld [vmem:[%s10 + $0xc] sm:$0xf]
    %v489 = vld [vmem:[%s11] sm:$0x1]
    %v491 = vlaneseq
    %v492 = vshrl.u32 %v491, 7
    %v493 = vsub.s32 0, %v492
    %v494 = vrot.slane %v489, %v493
    %v500 = vunpack.c.l.b16 %v485
    %v501 = vunpack.c.l.b16 %v486
    %v502 = vunpack.c.l.b16 %v487
    %v503 = vunpack.c.l.b16 %v488
    %v504 = vpack.c.b16 %v501, %v500
    %v505 = vpack.c.b16 %v503, %v502
    %508 = vmatprep.subr.bf16.mxu0 0
    %509 = vmatpush1.bf16.msra.mxu0 %v504
    %510 = vmatprep.subr.bf16.mxu0 0
    %511 = vmatpush1.bf16.msra.mxu0 %v505
    %512 = vmatprep.subr.bf16.mxu0 0
    %513 = vmatpush1.bf16.msra.mxu0 0
    %514 = vmatprep.subr.bf16.mxu0 0
    %515 = vmatpush1.bf16.msra.mxu0 0
    %516 = vmatprep.subr.bf16.mxu0 0
    %517 = vmatpush1.bf16.msra.mxu0 0
    %518 = vmatprep.subr.bf16.mxu0 0
    %519 = vmatpush1.bf16.msra.mxu0 0
    %520 = vmatprep.subr.bf16.mxu0 0
    %521 = vmatpush1.bf16.msra.mxu0 0
    %522 = vmatprep.subr.bf16.mxu0 0
    %523 = vmatpush1.bf16.msra.mxu0 0
    %524 = vmatprep.subr.bf16.mxu0 0
    %525 = vmatpush1.bf16.msra.mxu0 0
    %526 = vmatprep.subr.bf16.mxu0 0
    %527 = vmatpush1.bf16.msra.mxu0 0
    %528 = vmatprep.subr.bf16.mxu0 0
    %529 = vmatpush1.bf16.msra.mxu0 0
    %530 = vmatprep.subr.bf16.mxu0 0
    %531 = vmatpush1.bf16.msra.mxu0 0
    %532 = vmatprep.subr.bf16.mxu0 0
    %533 = vmatpush1.bf16.msra.mxu0 0
    %534 = vmatprep.subr.bf16.mxu0 0
    %535 = vmatpush1.bf16.msra.mxu0 0
    %536 = vmatprep.subr.bf16.mxu0 0
    %537 = vmatpush1.bf16.msra.mxu0 0
    %538 = vmatprep.subr.bf16.mxu0 0
    %539 = vmatpush1.bf16.msra.mxu0 0
    %540 = vmatprep.mubr.bf16.mxu0 0
    %541 = vmatmul.mubr.bf16.gmra.mrb[0].mxu0 %v128
    %v542 = vpop.f32.mrb[0].mxu0
    %v543 = vadd.f32 %v494, %v542
    %v544 = vpop.f32.mrb[0].mxu0
    %v545 = vpop.f32.mrb[0].mxu0
    %v546 = vadd.f32 %v494, %v545
    %v547 = vpop.f32.mrb[0].mxu0
    %548 = vmatprep.mubr.bf16.mxu0 0
    %549 = vmatmul.mubr.bf16.gmra.mrb[0].mxu0 %v131
    %v550 = vpop.f32.mrb[0].mxu0
    %v551 = vadd.f32 %v494, %v550
    %v552 = vpop.f32.mrb[0].mxu0
    %v553 = vpop.f32.mrb[0].mxu0
    %v554 = vadd.f32 %v494, %v553
    %v555 = vpop.f32.mrb[0].mxu0
    %556 = vdwg.mxu0
    %557 = vst.msk [vmem:[#allocation5] sm:$0xff] %vm126, %v543
    %558 = vst.msk [vmem:[#allocation5 + $0x8] sm:$0xff] %vm126, %v546
    %559 = vst.msk [vmem:[#allocation7] sm:$0xff] %vm126, %v551
    %560 = vst.msk [vmem:[#allocation7 + $0x8] sm:$0xff] %vm126, %v554
    %v561 = vld [vmem:[%s2] sm:$0xff]
    %v562 = vld [vmem:[%s2 + $0x8] sm:$0xff]
    %v563 = vld [vmem:[%s3] sm:$0x7]
    %565 = vset.pattern.permute.xlu0 0
    %566 = vperm.xlu0 %565, %v561
    %v567 = vpop.permute.xlu0 %566
    %570 = vset.pattern.permute.xlu0 0
    %571 = vperm.xlu0 %570, %v562
    %v572 = vpop.permute.xlu0 %571
    %v574 = vlaneseq
    %v575 = vshrl.u32 %v574, 7
    %v576 = vsub.s32 0, %v575
    %v577 = vrot.slane %v563, %v576
    %v578 = vsub.f32 %v567, %v577
    %v579 = vsub.f32 %v572, %v577
    %v580 = vmul.f32 %v578, %v578
    %v581 = vmul.f32 %v579, %v579
    %582 = vset.pattern.permute.xlu0 1
    %583 = vperm.xlu0 %582, %v561
    %v584 = vpop.permute.xlu0 %583
    %586 = vset.pattern.permute.xlu0 1
    %587 = vperm.xlu0 %586, %v562
    %v588 = vpop.permute.xlu0 %587
    %v590 = vlaneseq
    %v591 = vshrl.u32 %v590, 7
    %v592 = vsub.s32 1, %v591
    %v593 = vrot.slane %v563, %v592
    %v594 = vsub.f32 %v584, %v593
    %v595 = vsub.f32 %v588, %v593
    %v596 = vmul.f32 %v594, %v594
    %v597 = vmul.f32 %v595, %v595
    %v598 = vadd.f32 %v580, %v596
    %v599 = vadd.f32 %v581, %v597
    %600 = vset.pattern.permute.xlu0 2
    %601 = vperm.xlu0 %600, %v561
    %v602 = vpop.permute.xlu0 %601
    %604 = vset.pattern.permute.xlu0 2
    %605 = vperm.xlu0 %604, %v562
    %v606 = vpop.permute.xlu0 %605
    %v608 = vlaneseq
    %v609 = vshrl.u32 %v608, 7
    %v610 = vsub.s32 2, %v609
    %v611 = vrot.slane %v563, %v610
    %v612 = vsub.f32 %v602, %v611
    %v613 = vsub.f32 %v606, %v611
    %v614 = vmul.f32 %v612, %v612
    %v615 = vmul.f32 %v613, %v613
    %v616 = vadd.f32 %v598, %v614
    %v617 = vadd.f32 %v599, %v615
    %v618 = vmax.f32 %v616, 0.0
    %v619 = vmax.f32 %v617, 0.0
    %v620 = vrsqrt.pop %v618
    %v621 = vmul.f32 %v618, %v620
    %vm622 = vcmp.eq.f32.partialorder %v618, inf
    %v623 = vsel %vm622, %v618, %v621
    %vm624 = vcmp.eq.f32.partialorder %v618, 0.0
    %v625 = vand.u32 %v618, 2147483648
    %v626 = vsel %vm624, %v625, %v623
    %v627 = vrsqrt.pop %v619
    %v628 = vmul.f32 %v619, %v627
    %vm629 = vcmp.eq.f32.partialorder %v619, inf
    %v630 = vsel %vm629, %v619, %v628
    %vm631 = vcmp.eq.f32.partialorder %v619, 0.0
    %v632 = vand.u32 %v619, 2147483648
    %v633 = vsel %vm631, %v632, %v630
    %v634 = vrcp.pop 0.3
    %v635 = vmul.f32 %v626, %v634
    %v636 = vmul.f32 %v633, %v634
    %v637 = vmin.f32 %v635, 2.0
    %v638 = vmin.f32 %v636, 2.0
    %v639 = vmul.f32 %v637, %v637
    %v640 = vmul.f32 %v638, %v638
    %v641 = vmul.f32 %v639, %v637
    %v642 = vmul.f32 %v640, %v638
    %v643 = vrcp.pop 16.0
    %v644 = vmul.f32 %v641, %v643
    %v645 = vmul.f32 %v642, %v643
    %v646 = vadd.f32 %v644, 1.0
    %v647 = vadd.f32 %v645, 1.0
    %v648 = vmul.f32 %v637, 0.75
    %v649 = vmul.f32 %v638, 0.75
    %v650 = vsub.f32 %v646, %v648
    %v651 = vsub.f32 %v647, %v649
    %v652 = vmax.f32 %v650, 0.0
    %v653 = vmax.f32 %v651, 0.0
    %vm654 = vcmask 130048
    %655 = vst.msk [vmem:[#allocation8] sm:$0xff] %vm654, %v652
    %656 = vst.msk [vmem:[#allocation8 + $0x8] sm:$0xff] %vm654, %v653
    %v657 = vmul.f32 %v543, 0.17677669
    %v658 = vmul.f32 %v546, 0.17677669
    %v659 = vpack.c.bf16 %v658, %v657
    %v660 = vpack.c.bf16 %v554, %v551
    %v662 = vsel %vm126, %v659, 0
    %v665 = vsel %vm126, %v660, 0
    %667 = vmatprep.subr.bf16.mxu0 0
    %668 = vmatpush1.bf16.xpose.msra.mxu0 %v665
    %669 = vmatprep.subr.bf16.mxu0 0
    %670 = vmatpush1.bf16.xpose.msra.mxu0 0
    %671 = vmatprep.subr.bf16.mxu0 0
    %672 = vmatpush1.bf16.xpose.msra.mxu0 0
    %673 = vmatprep.subr.bf16.mxu0 0
    %674 = vmatpush1.bf16.xpose.msra.mxu0 0
    %675 = vmatprep.subr.bf16.mxu0 0
    %676 = vmatpush1.bf16.xpose.msra.mxu0 0
    %677 = vmatprep.subr.bf16.mxu0 0
    %678 = vmatpush1.bf16.xpose.msra.mxu0 0
    %679 = vmatprep.subr.bf16.mxu0 0
    %680 = vmatpush1.bf16.xpose.msra.mxu0 0
    %681 = vmatprep.subr.bf16.mxu0 0
    %682 = vmatpush1.bf16.xpose.msra.mxu0 0
    %683 = vmatprep.subr.bf16.mxu0 0
    %684 = vmatpush1.bf16.xpose.msra.mxu0 0
    %685 = vmatprep.subr.bf16.mxu0 0
    %686 = vmatpush1.bf16.xpose.msra.mxu0 0
    %687 = vmatprep.subr.bf16.mxu0 0
    %688 = vmatpush1.bf16.xpose.msra.mxu0 0
    %689 = vmatprep.subr.bf16.mxu0 0
    %690 = vmatpush1.bf16.xpose.msra.mxu0 0
    %691 = vmatprep.subr.bf16.mxu0 0
    %692 = vmatpush1.bf16.xpose.msra.mxu0 0
    %693 = vmatprep.subr.bf16.mxu0 0
    %694 = vmatpush1.bf16.xpose.msra.mxu0 0
    %695 = vmatprep.subr.bf16.mxu0 0
    %696 = vmatpush1.bf16.xpose.msra.mxu0 0
    %697 = vmatprep.subr.bf16.mxu0 0
    %698 = vmatpush1.bf16.xpose.msra.mxu0 0
    %699 = vmatprep.mubr.bf16.mxu0 0
    %700 = vmatmul.mubr.bf16.gmra.mrb[0].mxu0 %v662
    %v701 = vpop.f32.mrb[0].mxu0
    %v702 = vadd.f32 0.0, %v701
    %v703 = vpop.f32.mrb[0].mxu0
    %v704 = vpop.f32.mrb[0].mxu0
    %v705 = vadd.f32 0.0, %v704
    %v706 = vpop.f32.mrb[0].mxu0
    %707 = vdwg.mxu0
    %v708 = vsel %vm654, %v702, -inf
    %709 = vmax.xlane.f32.xlu0 %v708
    %v710 = vpop.xlane.xlu0 %709
    %v711 = vsel %vm654, %v705, -inf
    %712 = vmax.xlane.f32.xlu0 %v711
    %v713 = vpop.xlane.xlu0 %712
    %v714 = vmax.f32 %v710, %v713
    %v715 = vrot.slane %v714, 4
    %v716 = vmax.f32 %v714, %v715
    %v717 = vrot.slane %v716, 2
    %v718 = vmax.f32 %v716, %v717
    %v719 = vrot.slane %v718, 1
    %v720 = vmax.f32 %v718, %v719
    %v721 = vsub.f32 %v702, %v710
    %v722 = vsub.f32 %v705, %v713
    %v723 = vmul.f32 %v721, 1.442695
    %v724 = vpow.pop %v723
    %v725 = vmul.f32 %v722, 1.442695
    %v726 = vpow.pop %v725
    %v727 = vsub.f32 %v710, %v720
    %v728 = vsub.f32 %v713, %v720
    %v729 = vmul.f32 %v727, 1.442695
    %v730 = vpow.pop %v729
    %v731 = vmul.f32 %v728, 1.442695
    %v732 = vpow.pop %v731
    %v733 = vmul.f32 %v724, %v730
    %v734 = vmul.f32 %v726, %v732
    %v735 = vsel %vm654, %v724, 0.0
    %736 = vadd.xlane.f32.xlu0 %v735
    %v737 = vpop.xlane.xlu0 %736
    %v738 = vsel %vm654, %v726, 0.0
    %739 = vadd.xlane.f32.xlu0 %v738
    %v740 = vpop.xlane.xlu0 %739
    %v741 = vsel %vm654, %v733, 0.0
    %v742 = vsel %vm654, %v734, 0.0
    %v743 = vadd.f32 %v741, %v742
    %v744 = vrot.slane %v743, 4
    %v745 = vadd.f32 %v743, %v744
    %v746 = vrot.slane %v745, 2
    %v747 = vadd.f32 %v745, %v746
    %v748 = vrot.slane %v747, 1
    %v749 = vadd.f32 %v747, %v748
    %v750 = vrcp.pop %v737
    %v751 = vrcp.pop %v740
    %v752 = vmul.f32 %v750, %v393
    %v753 = vmul.f32 %v751, %v395
    %v754 = vadd.f32 %v749, 1e-30
    %v755 = vrcp.pop %v754
    %v756 = vmul.f32 %v755, %v479
    %v757 = vmul.f32 %v724, %v752
    %v758 = vmul.f32 %v726, %v753
    %v759 = vlaneseq
    %v760 = vshrl.u32 %v759, 7
    %v761 = vsub.s32 0, %v760
    %v762 = vrot.slane %v756, %v761
    %v763 = vmul.f32 %v733, %v762
    %v764 = vmul.f32 %v734, %v762
    %v765 = vmul.f32 %v757, %v763
    %v766 = vmul.f32 %v758, %v764
    %767 = vst.msk [vmem:[#allocation10] sm:$0xff] %vm654, %v765
    %768 = vst.msk [vmem:[#allocation10 + $0x8] sm:$0xff] %vm654, %v766
    // Predicated region
    $region54: #{tpu_custom_call.1} parent=1 // pred_check
      _
    $region55: #{tpu_custom_call.1} parent=1 // pred_check_branch
      %770 = sbr.rel (0) target = $region57
    $region56: #{tpu_custom_call.1} parent=1 // pred_region
      _
    $region57: #{tpu_custom_call.1} parent=1 // pred_fallthru
      _
    // Predicated region
    $region58: #{tpu_custom_call.1} parent=1 // pred_check
      _
    $region59: #{tpu_custom_call.1} parent=1 // pred_check_branch
      %772 = sbr.rel (0) target = $region61
    $region60: #{tpu_custom_call.1} parent=1 // pred_region
      %s774 = ssub.s32 16, 16
      %775 = vsyncadd [#allocation4], %s774
      %s777 = sshll.u32 [#allocation3], 4
      %s778 = int_to_ptr.vmem [resolvable:$true] %s777
      %780 = dma.vmem_to_hbm [thread:$0]  %s778, 16, %s14, [#allocation4]
    $region61: #{tpu_custom_call.1} parent=1 // pred_fallthru
      _
    // Predicated region
    $region62: #{tpu_custom_call.1} parent=1 // pred_check
      _
    $region63: #{tpu_custom_call.1} parent=1 // pred_check_branch
      %782 = sbr.rel (0) target = $region65
    $region64: #{tpu_custom_call.1} parent=1 // pred_region
      %s784 = ssub.s32 256, 256
      %785 = vsyncadd [#allocation6], %s784
      %s786 = sshll.u32 [#allocation5], 4
      %s787 = int_to_ptr.vmem [resolvable:$true] %s786
      %792 = dma.vmem_to_hbm [thread:$0]  %s787, 256, %s15, [#allocation6], 128, 128, 8
    $region65: #{tpu_custom_call.1} parent=1 // pred_fallthru
      _
    // Predicated region
    $region66: #{tpu_custom_call.1} parent=1 // pred_check
      _
    $region67: #{tpu_custom_call.1} parent=1 // pred_check_branch
      %794 = sbr.rel (0) target = $region69
    $region68: #{tpu_custom_call.1} parent=1 // pred_region
      %s796 = ssub.s32 256, 256
      %797 = vsyncadd [#allocation6], %s796
      %s798 = sshll.u32 [#allocation7], 4
      %s799 = int_to_ptr.vmem [resolvable:$true] %s798
      %804 = dma.vmem_to_hbm [thread:$0]  %s799, 256, %s16, [#allocation6], 128, 128, 8
    $region69: #{tpu_custom_call.1} parent=1 // pred_fallthru
      _
    // Predicated region
    $region70: #{tpu_custom_call.1} parent=1 // pred_check
      _
    $region71: #{tpu_custom_call.1} parent=1 // pred_check_branch
      %806 = sbr.rel (0) target = $region73
    $region72: #{tpu_custom_call.1} parent=1 // pred_region
      %s808 = ssub.s32 256, 256
      %809 = vsyncadd [#allocation9], %s808
      %s810 = sshll.u32 [#allocation8], 4
      %s811 = int_to_ptr.vmem [resolvable:$true] %s810
      %816 = dma.vmem_to_hbm [thread:$0]  %s811, 256, %s17, [#allocation9], 128, 128, 8
    $region73: #{tpu_custom_call.1} parent=1 // pred_fallthru
      _
    // Predicated region
    $region74: #{tpu_custom_call.1} parent=1 // pred_check
      _
    $region75: #{tpu_custom_call.1} parent=1 // pred_check_branch
      %818 = sbr.rel (0) target = $region77
    $region76: #{tpu_custom_call.1} parent=1 // pred_region
      %s820 = ssub.s32 256, 256
      %821 = vsyncadd [#allocation9], %s820
      %s822 = sshll.u32 [#allocation10], 4
      %s823 = int_to_ptr.vmem [resolvable:$true] %s822
      %828 = dma.vmem_to_hbm [thread:$0]  %s823, 256, %s18, [#allocation9], 128, 128, 8
    $region77: #{tpu_custom_call.1} parent=1 // pred_fallthru
      _
    // Predicated region
    $region78: #{tpu_custom_call.1} parent=1 // pred_check
      _
    $region79: #{tpu_custom_call.1} parent=1 // pred_check_branch
      %830 = sbr.rel (0) target = $region81
    $region80: #{tpu_custom_call.1} parent=1 // pred_region
      _
    $region81: #{tpu_custom_call.1} parent=1 // pred_fallthru
      _
    // Predicated region
    $region82: #{tpu_custom_call.1} parent=1 // pred_check
      _
    $region83: #{tpu_custom_call.1} parent=1 // pred_check_branch
      %832 = sbr.rel (0) target = $region85
    $region84: #{tpu_custom_call.1} parent=1 // pred_region
      %833 = dma.done [#allocation4], 16
    $region85: #{tpu_custom_call.1} parent=1 // pred_fallthru
      _
    // Predicated region
    $region86: #{tpu_custom_call.1} parent=1 // pred_check
      _
    $region87: #{tpu_custom_call.1} parent=1 // pred_check_branch
      %835 = sbr.rel (0) target = $region89
    $region88: #{tpu_custom_call.1} parent=1 // pred_region
      %836 = dma.done [#allocation6], 256
    $region89: #{tpu_custom_call.1} parent=1 // pred_fallthru
      _
    // Predicated region
    $region90: #{tpu_custom_call.1} parent=1 // pred_check
      _
    $region91: #{tpu_custom_call.1} parent=1 // pred_check_branch
      %838 = sbr.rel (0) target = $region93
    $region92: #{tpu_custom_call.1} parent=1 // pred_region
      %839 = dma.done [#allocation6], 256
    $region93: #{tpu_custom_call.1} parent=1 // pred_fallthru
      _
    // Predicated region
    $region94: #{tpu_custom_call.1} parent=1 // pred_check
      _
    $region95: #{tpu_custom_call.1} parent=1 // pred_check_branch
      %841 = sbr.rel (0) target = $region97
    $region96: #{tpu_custom_call.1} parent=1 // pred_region
      %842 = dma.done [#allocation9], 256
    $region97: #{tpu_custom_call.1} parent=1 // pred_fallthru
      _
    // Predicated region
    $region98: #{tpu_custom_call.1} parent=1 // pred_check
      _
    $region99: #{tpu_custom_call.1} parent=1 // pred_check_branch
      %844 = sbr.rel (0) target = $region101
    $region100: #{tpu_custom_call.1} parent=1 // pred_region
      %845 = dma.done [#allocation9], 256
    $region101: #{tpu_custom_call.1} parent=1 // pred_fallthru
      _
    %846 = vsyncpa [#allocation4], 1
    %847 = vsyncpa [#allocation6], 1
    %848 = vsyncpa [#allocation9], 1

</llo_original>
